<compile_context>
chip_gen: v5e
topology: v5e:2x2
jax: 0.10.0
libtpu: 0.0.40
codegen_flags: <defaults>
</compile_context>

<pallas_src>
import math
import functools

import jax
import jax.numpy as jnp
from jax import lax
from jax.experimental import pallas as pl
from jax.experimental.pallas import tpu as pltpu


# ----------------------------------------------------------------------------
# Tiling helper
# ----------------------------------------------------------------------------
def _pick_tile(dim, pref, align):
    """Largest tile <= pref that evenly divides `dim`.

    Prefers multiples of `align` (8 for sublane axes, 128 for lane axes);
    falls back to the full dimension (a full-extent block is always legal).
    """
    if dim <= pref:
        return dim
    t = (pref // align) * align
    while t >= align:
        if dim % t == 0:
            return t
        t -= align
    return dim


# ----------------------------------------------------------------------------
# Tiled linear kernels (K-reduction on the innermost grid axis)
# ----------------------------------------------------------------------------
def _matmul_kernel(x_ref, w_ref, o_ref, acc_ref):
    @pl.when(pl.program_id(2) == 0)
    def _init():
        acc_ref[...] = jnp.zeros_like(acc_ref)

    acc_ref[...] += jnp.dot(x_ref[...], w_ref[...],
                            preferred_element_type=jnp.float32)

    @pl.when(pl.program_id(2) == pl.num_programs(2) - 1)
    def _fin():
        o_ref[...] = acc_ref[...].astype(o_ref.dtype)


def _matmul_bias_kernel(x_ref, w_ref, b_ref, o_ref, acc_ref):
    @pl.when(pl.program_id(2) == 0)
    def _init():
        acc_ref[...] = jnp.zeros_like(acc_ref)

    acc_ref[...] += jnp.dot(x_ref[...], w_ref[...],
                            preferred_element_type=jnp.float32)

    @pl.when(pl.program_id(2) == pl.num_programs(2) - 1)
    def _fin():
        o_ref[...] = (acc_ref[...]
                      + b_ref[...].astype(jnp.float32)).astype(o_ref.dtype)


def pallas_linear(x2d, w, b=None, *, tm_pref=256, tn_pref=256, tk_pref=512):
    """x2d: (M, K), w: (K, N), optional b: (N,) -> (M, N), tiled + pipelined."""
    M, K = x2d.shape
    Kw, N = w.shape
    assert K == Kw, (K, Kw)

    tm = _pick_tile(M, tm_pref, 8)
    tn = _pick_tile(N, tn_pref, 128)
    tk = _pick_tile(K, tk_pref, 128)
    grid = (M // tm, N // tn, K // tk)

    itemsize = jnp.dtype(x2d.dtype).itemsize
    cost = pl.CostEstimate(
        flops=2 * M * N * K,
        transcendentals=0,
        bytes_accessed=itemsize * (M * K + K * N + M * N),
    )

    if b is None:
        kernel = _matmul_kernel
        in_specs = [
            pl.BlockSpec((tm, tk), lambda i, j, k: (i, k)),
            pl.BlockSpec((tk, tn), lambda i, j, k: (k, j)),
        ]
        operands = (x2d, w)
    else:
        kernel = _matmul_bias_kernel
        in_specs = [
            pl.BlockSpec((tm, tk), lambda i, j, k: (i, k)),
            pl.BlockSpec((tk, tn), lambda i, j, k: (k, j)),
            pl.BlockSpec((1, tn), lambda i, j, k: (0, j)),
        ]
        operands = (x2d, w, b.reshape(1, N))

    return pl.pallas_call(
        kernel,
        out_shape=jax.ShapeDtypeStruct((M, N), x2d.dtype),
        grid_spec=pltpu.PrefetchScalarGridSpec(
            num_scalar_prefetch=0,
            grid=grid,
            in_specs=in_specs,
            out_specs=pl.BlockSpec((tm, tn), lambda i, j, k: (i, j)),
            scratch_shapes=[pltpu.VMEM((tm, tn), jnp.float32)],
        ),
        compiler_params=pltpu.CompilerParams(
            dimension_semantics=("parallel", "parallel", "arbitrary")),
        cost_estimate=cost,
    )(*operands)


# ----------------------------------------------------------------------------
# Output projection fused with the head-merge "un-transpose"
# ----------------------------------------------------------------------------
def _out_proj_kernel(x_ref, w_ref, b_ref, o_ref, acc_ref):
    # x_ref block is (1, tm, D) taken straight out of the (B*H, N, D) attention
    # output; the K grid axis iterates heads, so no standalone transpose / HBM
    # round-trip is needed between attention and the output projection.
    @pl.when(pl.program_id(2) == 0)
    def _init():
        acc_ref[...] = jnp.zeros_like(acc_ref)

    acc_ref[...] += jnp.dot(x_ref[0], w_ref[...],
                            preferred_element_type=jnp.float32)

    @pl.when(pl.program_id(2) == pl.num_programs(2) - 1)
    def _fin():
        o_ref[...] = (acc_ref[...]
                      + b_ref[...].astype(jnp.float32)).astype(o_ref.dtype)


def pallas_out_proj(out_bh, w, b, *, B, N, H, D, tm_pref=256, tn_pref=256):
    """out_bh: (B*H, N, D) attention output, w: (H*D, C), b: (C,) -> (B*N, C).

    Equivalent to reshaping out_bh to (B, N, H*D) (the head-merge transpose)
    and applying the linear layer, but the "transpose" happens inside the
    BlockSpec index_map so the activation tensor never makes an extra HBM
    round-trip.  The reduction axis iterates heads (K-step = D per MXU pass).
    """
    inner, C = w.shape
    assert inner == H * D, (inner, H, D)
    M = B * N

    tm = _pick_tile(N, tm_pref, 8)      # sequence tile; divides N by construction
    tn = _pick_tile(C, tn_pref, 128)
    nb = N // tm
    grid = (B * nb, C // tn, H)

    itemsize = jnp.dtype(out_bh.dtype).itemsize
    cost = pl.CostEstimate(
        flops=2 * M * inner * C,
        transcendentals=0,
        bytes_accessed=itemsize * (M * inner + inner * C + M * C),
    )

    return pl.pallas_call(
        _out_proj_kernel,
        out_shape=jax.ShapeDtypeStruct((M, C), out_bh.dtype),
        grid_spec=pltpu.PrefetchScalarGridSpec(
            num_scalar_prefetch=0,
            grid=grid,
            in_specs=[
                # (b, h) -> leading index of the (B*H, N, D) attention output.
                pl.BlockSpec((1, tm, D),
                             lambda i, j, k: ((i // nb) * H + k, i % nb, 0)),
                pl.BlockSpec((D, tn), lambda i, j, k: (k, j)),
                pl.BlockSpec((1, tn), lambda i, j, k: (0, j)),
            ],
            out_specs=pl.BlockSpec((tm, tn), lambda i, j, k: (i, j)),
            scratch_shapes=[pltpu.VMEM((tm, tn), jnp.float32)],
        ),
        compiler_params=pltpu.CompilerParams(
            dimension_semantics=("parallel", "parallel", "arbitrary")),
        cost_estimate=cost,
    )(out_bh, w, b.reshape(1, C))


# ----------------------------------------------------------------------------
# Flash-attention kernel (online softmax, per batch*head)
# ----------------------------------------------------------------------------
def _flash_attn_kernel(q_ref, k_ref, v_ref, o_ref, m_sc, l_sc, acc_sc, *, scale):
    ki = pl.program_id(2)

    @pl.when(ki == 0)
    def _init():
        m_sc[...] = jnp.full_like(m_sc, -jnp.inf)
        l_sc[...] = jnp.zeros_like(l_sc)
        acc_sc[...] = jnp.zeros_like(acc_sc)

    q = q_ref[0]                                                # (Tq, D)
    if scale is not None:
        # Normally folded into the query projection weights; kept for
        # generality when this kernel is used standalone.
        q = q * jnp.asarray(scale, q.dtype)
    k = k_ref[0]                                                # (Tk, D)

    # q @ k^T without an explicit transpose: contract the last dim of both
    # operands (feeds the MXU directly, no XLU transpose of the K tile).
    s = lax.dot_general(q, k, (((1,), (1,)), ((), ())),
                        preferred_element_type=jnp.float32)     # (Tq, Tk)

    m_prev = m_sc[...]
    m_new = jnp.maximum(m_prev, jnp.max(s, axis=-1, keepdims=True))
    alpha = jnp.exp(m_prev - m_new)
    p = jnp.exp(s - m_new)                                      # un-normalized
    l_sc[...] = alpha * l_sc[...] + jnp.sum(p, axis=-1, keepdims=True)
    acc_sc[...] = alpha * acc_sc[...] + jnp.dot(
        p.astype(v_ref.dtype), v_ref[0], preferred_element_type=jnp.float32)
    m_sc[...] = m_new

    @pl.when(ki == pl.num_programs(2) - 1)
    def _fin():
        # Deferred softmax normalization: one (Tq,1) reciprocal + Tq*D muls.
        inv_l = pl.reciprocal(l_sc[...], approx=False)
        o_ref[0] = (acc_sc[...] * inv_l).astype(o_ref.dtype)


def pallas_flash_attention(q, k, v, *, scale=None, tq_pref=256, tk_pref=512):
    """q, k, v: (B*H, N, D) -> (B*H, N, D) = softmax(q k^T [* scale]) v.

    If `scale` is None the caller is expected to have pre-scaled q (e.g. the
    1/sqrt(D) factor folded into the query projection weights).
    """
    BH, N, D = q.shape
    tq = _pick_tile(N, tq_pref, 8)
    tk = _pick_tile(N, tk_pref, 8)
    grid = (BH, N // tq, N // tk)

    itemsize = jnp.dtype(q.dtype).itemsize
    cost = pl.CostEstimate(
        flops=4 * BH * N * N * D,              # QK^T + PV
        transcendentals=BH * N * N,            # exp
        bytes_accessed=itemsize * 4 * BH * N * D,
    )

    kernel = functools.partial(_flash_attn_kernel, scale=scale)
    return pl.pallas_call(
        kernel,
        out_shape=jax.ShapeDtypeStruct((BH, N, D), q.dtype),
        grid_spec=pltpu.PrefetchScalarGridSpec(
            num_scalar_prefetch=0,
            grid=grid,
            in_specs=[
                pl.BlockSpec((1, tq, D), lambda b, qi, ki: (b, qi, 0)),
                pl.BlockSpec((1, tk, D), lambda b, qi, ki: (b, ki, 0)),
                pl.BlockSpec((1, tk, D), lambda b, qi, ki: (b, ki, 0)),
            ],
            out_specs=pl.BlockSpec((1, tq, D), lambda b, qi, ki: (b, qi, 0)),
            scratch_shapes=[
                pltpu.VMEM((tq, 1), jnp.float32),   # running max m
                pltpu.VMEM((tq, 1), jnp.float32),   # running sum l
                pltpu.VMEM((tq, D), jnp.float32),   # un-normalized output acc
            ],
        ),
        compiler_params=pltpu.CompilerParams(
            dimension_semantics=("parallel", "parallel", "arbitrary")),
        cost_estimate=cost,
    )(q, k, v)


# ----------------------------------------------------------------------------
# Module: parameter init + forward
# ----------------------------------------------------------------------------
class MemoryEfficientCrossAttentionPallas:
    """JAX/Pallas port of MemoryEfficientCrossAttention, context=None path.

    Dropout p=0.0 (eval) -> identity.
    """

    def __init__(self, query_dim, context_dim=None, heads=8, dim_head=64,
                 dropout=0.0, key=None):
        if context_dim is not None:
            # TODO(synk): ROELinear-based context path has no definition in the
            #             provided module and is not implemented.
            raise NotImplementedError("context_dim (ROELinear) path not implemented")
        del dropout  # p=0.0 at eval -> identity

        self.heads = heads
        self.dim_head = dim_head
        inner_dim = dim_head * heads
        self.inner_dim = inner_dim
        self.query_dim = query_dim

        key = jax.random.PRNGKey(0) if key is None else key
        k_q, k_k, k_v, k_ow, k_ob = jax.random.split(key, 5)

        def linear_init(k, fan_in, fan_out):
            # matches torch nn.Linear default: U(-1/sqrt(fan_in), 1/sqrt(fan_in))
            bound = 1.0 / math.sqrt(fan_in)
            # stored as (fan_in, fan_out) so forward is x @ W
            return jax.random.uniform(k, (fan_in, fan_out), jnp.float32,
                                      -bound, bound)

        # "True" (unscaled) parameters, used by the pure-JAX reference.
        self.w_q = linear_init(k_q, query_dim, inner_dim)
        self.w_k = linear_init(k_k, query_dim, inner_dim)
        self.w_v = linear_init(k_v, query_dim, inner_dim)

        # Fused QKV weight for the kernel path: activations are read from HBM
        # once, and the attention scale 1/sqrt(dim_head) is folded into the
        # query columns (zero runtime cost, removes a per-tile multiply from
        # the flash-attention inner loop).
        scale = 1.0 / math.sqrt(dim_head)
        self.w_qkv = jnp.concatenate(
            [self.w_q * scale, self.w_k, self.w_v], axis=1)   # (C, 3*inner)

        self.w_o = linear_init(k_ow, inner_dim, query_dim)
        bound = 1.0 / math.sqrt(inner_dim)
        self.b_o = jax.random.uniform(k_ob, (query_dim,), jnp.float32,
                                      -bound, bound)

    def __call__(self, x, context=None, mask=None):
        if context is not None:
            # TODO(synk): ROELinear context path not implemented.
            raise NotImplementedError
        if mask is not None:
            raise NotImplementedError  # matches the reference behaviour

        B, N, C = x.shape
        H, D = self.heads, self.dim_head
        inner = H * D

        # Fused QKV projection: one tiled matmul, lane-dense 3*inner output.
        x2d = x.reshape(B * N, C)
        qkv = pallas_linear(x2d, self.w_qkv)                  # (B*N, 3*inner)

        # (B*N, 3*H*D) -> (3, B*H, N, D)   (single XLA transpose)
        qkv = (qkv.reshape(B, N, 3, H, D)
                  .transpose(2, 0, 3, 1, 4)
                  .reshape(3, B * H, N, D))
        qh, kh, vh = qkv[0], qkv[1], qkv[2]

        # q is already pre-scaled (scale folded into w_q).
        out_bh = pallas_flash_attention(qh, kh, vh, scale=None)   # (B*H, N, D)

        if D % 8 == 0 or H == 1:
            # Head-merge transpose fused into the output projection's DMA.
            out2d = pallas_out_proj(out_bh, self.w_o, self.b_o,
                                    B=B, N=N, H=H, D=D)           # (B*N, C)
        else:
            # Fallback: explicit transpose + plain tiled linear.
            out = (out_bh.reshape(B, H, N, D)
                        .transpose(0, 2, 1, 3)
                        .reshape(B * N, inner))
            out2d = pallas_linear(out, self.w_o, self.b_o)        # (B*N, C)

        return out2d.reshape(B, N, C)


# ----------------------------------------------------------------------------
# Pure-JAX reference (for verification)
# ----------------------------------------------------------------------------
def reference_forward(mod, x):
    B, N, C = x.shape
    H, D = mod.heads, mod.dim_head
    q = x @ mod.w_q
    k = x @ mod.w_k
    v = x @ mod.w_v

    def to_bh(t):
        return t.reshape(B, N, H, D).transpose(0, 2, 1, 3).reshape(B * H, N, D)

    qh, kh, vh = map(to_bh, (q, k, v))
    s = jnp.einsum("bnd,bmd->bnm", qh, kh) / math.sqrt(D)
    p = jax.nn.softmax(s, axis=-1)
    o = jnp.einsum("bnm,bmd->bnd", p, vh)
    o = o.reshape(B, H, N, D).transpose(0, 2, 1, 3).reshape(B, N, H * D)
    return o @ mod.w_o + mod.b_o


# ----------------------------------------------------------------------------
if __name__ == "__main__":
    # Small shapes consistent with the module's forward.
    B, N = 2, 16
    query_dim = 32
    heads, dim_head = 2, 16

    key = jax.random.PRNGKey(0)
    k_x, k_params = jax.random.split(key)
    x = jax.random.normal(k_x, (B, N, query_dim), jnp.float32)

    mod = MemoryEfficientCrossAttentionPallas(
        query_dim=query_dim, heads=heads, dim_head=dim_head, key=k_params)

    out = jax.block_until_ready(mod(x))
    ref = reference_forward(mod, x)

    assert out.shape == (B, N, query_dim)
    assert jnp.allclose(out, ref, atol=1e-4, rtol=1e-4), "mismatch vs reference"

    print("KERNEL_OK")
</pallas_src>

<mosaic_0001>
module attributes {stable_mosaic.version = 11 : i64} {
  func.func @_matmul_kernel(%arg0: i32, %arg1: i32, %arg2: i32, %arg3: memref<32x32xf32, #tpu.memory_space<vmem>>, %arg4: memref<32x96xf32, #tpu.memory_space<vmem>>, %arg5: memref<32x96xf32, #tpu.memory_space<vmem>>, %arg6: memref<32x96xf32, #tpu.memory_space<vmem>>) attributes {dimension_semantics = [#tpu.dimension_semantics<parallel>, #tpu.dimension_semantics<parallel>, #tpu.dimension_semantics<arbitrary>], iteration_bounds = array<i64: 1, 1, 1>, scalar_prefetch = 0 : i64, scratch_operands = 1 : i64, tpu.core_type = #tpu.core_type<tc>, window_params = [{transform_indices = @transform_0, window_bounds = array<i64: 32, 32>}, {transform_indices = @transform_1, window_bounds = array<i64: 32, 96>}, {transform_indices = @transform_2, window_bounds = array<i64: 32, 96>}]} {
    %c0_i32 = arith.constant 0 : i32
    %0 = arith.cmpi eq, %arg2, %c0_i32 : i32
    %1 = arith.extui %0 : i1 to i32
    %c0_i32_0 = arith.constant 0 : i32
    %2 = arith.cmpi ne, %1, %c0_i32_0 : i32
    scf.if %2 {
      %cst_10 = arith.constant 0.000000e+00 : f32
      %12 = vector.broadcast %cst_10 : f32 to vector<32x96xf32>
      %c0_11 = arith.constant 0 : index
      %c0_12 = arith.constant 0 : index
      %13 = vector.load %arg6[%c0_11, %c0_12] : memref<32x96xf32, #tpu.memory_space<vmem>>, vector<32x96xf32>
      tpu.vector_store %arg6[%c0_11, %c0_12], %12 {strides = array<i32>} : memref<32x96xf32, #tpu.memory_space<vmem>>, vector<32x96xf32>,
    } else {
    }
    %c0 = arith.constant 0 : index
    %c0_1 = arith.constant 0 : index
    %3 = vector.load %arg6[%c0, %c0_1] : memref<32x96xf32, #tpu.memory_space<vmem>>, vector<32x96xf32>
    %c0_2 = arith.constant 0 : index
    %c0_3 = arith.constant 0 : index
    %4 = vector.load %arg3[%c0_2, %c0_3] : memref<32x32xf32, #tpu.memory_space<vmem>>, vector<32x32xf32>
    %c0_4 = arith.constant 0 : index
    %c0_5 = arith.constant 0 : index
    %5 = vector.load %arg4[%c0_4, %c0_5] : memref<32x96xf32, #tpu.memory_space<vmem>>, vector<32x96xf32>
    %cst = arith.constant dense<0.000000e+00> : vector<32x96xf32>
    %6 = tpu.matmul %4, %5, %cst {dimension_numbers = #tpu.dot_dimension_numbers<[1], [0], [0], [1], [0, 0, 1, 1], [], []>} : vector<32x32xf32>, vector<32x96xf32>, vector<32x96xf32> -> vector<32x96xf32>
    %7 = arith.addf %3, %6 : vector<32x96xf32>
    %c0_6 = arith.constant 0 : index
    %c0_7 = arith.constant 0 : index
    %8 = vector.load %arg6[%c0_6, %c0_7] : memref<32x96xf32, #tpu.memory_space<vmem>>, vector<32x96xf32>
    tpu.vector_store %arg6[%c0_6, %c0_7], %7 {strides = array<i32>} : memref<32x96xf32, #tpu.memory_space<vmem>>, vector<32x96xf32>,
    %c0_i32_8 = arith.constant 0 : i32
    %9 = arith.cmpi eq, %arg2, %c0_i32_8 : i32
    %10 = arith.extui %9 : i1 to i32
    %c0_i32_9 = arith.constant 0 : i32
    %11 = arith.cmpi ne, %10, %c0_i32_9 : i32
    scf.if %11 {
      %c0_10 = arith.constant 0 : index
      %c0_11 = arith.constant 0 : index
      %12 = vector.load %arg6[%c0_10, %c0_11] : memref<32x96xf32, #tpu.memory_space<vmem>>, vector<32x96xf32>
      %c0_12 = arith.constant 0 : index
      %c0_13 = arith.constant 0 : index
      %13 = vector.load %arg5[%c0_12, %c0_13] : memref<32x96xf32, #tpu.memory_space<vmem>>, vector<32x96xf32>
      tpu.vector_store %arg5[%c0_12, %c0_13], %12 {strides = array<i32>} : memref<32x96xf32, #tpu.memory_space<vmem>>, vector<32x96xf32>,
    } else {
    }
    return
  }
  func.func @transform_0(%arg0: i32, %arg1: i32, %arg2: i32) -> (i32, i32) {
    %c0_i32 = arith.constant 0 : i32
    return %arg0, %arg2 : i32, i32
  }
  func.func @transform_1(%arg0: i32, %arg1: i32, %arg2: i32) -> (i32, i32) {
    %c0_i32 = arith.constant 0 : i32
    return %arg2, %arg1 : i32, i32
  }
  func.func @transform_2(%arg0: i32, %arg1: i32, %arg2: i32) -> (i32, i32) {
    %c0_i32 = arith.constant 0 : i32
    return %arg0, %arg1 : i32, i32
  }
}

</mosaic_0001>

<llo_original>
// kernel: tpu_custom_call.1
$region0: #{tpu_custom_call.1}
  #allocation0 [shape = 'u32[]', space=smem, size = 0x4, offset = 0x4, fixed_abs, tag = 'smem constant byte address 0x4 - core index']
  #allocation1 [shape = 'u32[72,128]{1,0:T(1,128)}', space=vmem, size = 0x9000, scoped, tag = 'internal scratch']
  #allocation2 [shape = 'f32[32,96]{1,0:T(8,128)}', space=vmem, size = 0x4000, scoped, tag = 'scratch operand']
  %s0 = inlined_call_operand.hbm [shape: f32[32,32], index: 0, kind: input, shape index: {}]
  %s1 = inlined_call_operand.hbm [shape: f32[32,96], index: 1, kind: input, shape index: {}]
  %s2 = inlined_call_operand.hbm [shape: f32[32,96], index: 2, kind: output, shape index: {}]
  %s3 = sld [smem:[#allocation0]]
  $region34: #{tpu_custom_call.1} parent=0
    _
  %s5 = ssub.s32 1, %s3
  %s6 = scalar_select 0, %s5, %s3
  $region1: #{tpu_custom_call.1} parent=0
    #allocation3 [shape = 'u8[16384]{0}', space=vmem, size = 0x4000, scoped, tag = 'input window, operand 0, single buffered']
    #allocation4 [shape = 's32[1]{0}', space=sflag, size = 0x4, scoped, tag = 'scoped memory for tpu_custom_call.1']
    #allocation5 [shape = 's32[1]{0}', space=sflag, size = 0x4, scoped, tag = 'scoped memory for tpu_custom_call.1']
    #allocation6 [shape = 'u8[16384]{0}', space=vmem, size = 0x4000, scoped, tag = 'input window, operand 1, single buffered']
    #allocation7 [shape = 's32[1]{0}', space=sflag, size = 0x4, scoped, tag = 'scoped memory for tpu_custom_call.1']
    #allocation8 [shape = 'u8[16384]{0}', space=vmem, size = 0x4000, scoped, tag = 'output window, operand 0, single buffered']
    %7 = vsyncpa [#allocation4], 0
    %8 = vsyncpa [#allocation7], 0
    %9 = vsyncpa [#allocation5], 0
    // Predicated region
    $region2: #{tpu_custom_call.1} parent=1 // pred_check
      _
    $region3: #{tpu_custom_call.1} parent=1 // pred_check_branch
      %11 = sbr.rel (0) target = $region5
    $region4: #{tpu_custom_call.1} parent=1 // pred_region
      %13 = vsyncadd [#allocation4], 0
      %s14 = sshll.u32 %s0, 4
      %s15 = int_to_ptr.hbm [resolvable:$true] %s14
      %s16 = sshll.u32 [#allocation3], 4
      %s17 = int_to_ptr.vmem [resolvable:$true] %s16
      %22 = dma.hbm_to_vmem [thread:$0]  %s15, 512, %s17, [#allocation4], 128, 128, 8
    $region5: #{tpu_custom_call.1} parent=1 // pred_fallthru
      _
    // Predicated region
    $region6: #{tpu_custom_call.1} parent=1 // pred_check
      _
    $region7: #{tpu_custom_call.1} parent=1 // pred_check_branch
      %24 = sbr.rel (0) target = $region9
    $region8: #{tpu_custom_call.1} parent=1 // pred_region
      %26 = vsyncadd [#allocation7], 0
      %s27 = sshll.u32 %s1, 4
      %s28 = int_to_ptr.hbm [resolvable:$true] %s27
      %s29 = sshll.u32 [#allocation6], 4
      %s30 = int_to_ptr.vmem [resolvable:$true] %s29
      %35 = dma.hbm_to_vmem [thread:$0]  %s28, 512, %s30, [#allocation7], 128, 128, 8
    $region9: #{tpu_custom_call.1} parent=1 // pred_fallthru
      _
    // Predicated region
    $region10: #{tpu_custom_call.1} parent=1 // pred_check
      _
    $region11: #{tpu_custom_call.1} parent=1 // pred_check_branch
      %37 = sbr.rel (0) target = $region13
    $region12: #{tpu_custom_call.1} parent=1 // pred_region
      %39 = dma.done [#allocation4], 512
    $region13: #{tpu_custom_call.1} parent=1 // pred_fallthru
      _
    // Predicated region
    $region14: #{tpu_custom_call.1} parent=1 // pred_check
      _
    $region15: #{tpu_custom_call.1} parent=1 // pred_check_branch
      %41 = sbr.rel (0) target = $region17
    $region16: #{tpu_custom_call.1} parent=1 // pred_region
      %43 = dma.done [#allocation7], 512
    $region17: #{tpu_custom_call.1} parent=1 // pred_fallthru
      _
    %p44 = scmp.eq.s32.totalorder 0, 0
    // Predicated region
    $region18: #{tpu_custom_call.1} parent=1 // pred_check
      %p45 = pneg %p44
    $region19: #{tpu_custom_call.1} parent=1 // pred_check_branch
      %47 = sbr.rel (%p45) target = $region21
    $region20: #{tpu_custom_call.1} parent=1 // pred_region
      %vm48 = vcmask 785408
      %49 = vst.msk [vmem:[#allocation2] sm:$0xff] %vm48, 0.0
      %50 = vst.msk [vmem:[#allocation2 + $0x8] sm:$0xff] %vm48, 0.0
      %51 = vst.msk [vmem:[#allocation2 + $0x10] sm:$0xff] %vm48, 0.0
      %52 = vst.msk [vmem:[#allocation2 + $0x18] sm:$0xff] %vm48, 0.0
    $region21: #{tpu_custom_call.1} parent=1 // pred_fallthru
      _
    %v53 = vld [vmem:[#allocation2] sm:$0xff]
    %v54 = vld [vmem:[#allocation2 + $0x8] sm:$0xff]
    %v55 = vld [vmem:[#allocation2 + $0x10] sm:$0xff]
    %v56 = vld [vmem:[#allocation2 + $0x18] sm:$0xff]
    %v57 = vld [vmem:[#allocation3] sm:$0xff]
    %v58 = vld [vmem:[#allocation3 + $0x8] sm:$0xff]
    %v59 = vld [vmem:[#allocation3 + $0x10] sm:$0xff]
    %v60 = vld [vmem:[#allocation3 + $0x18] sm:$0xff]
    %v61 = vld [vmem:[#allocation6] sm:$0xff]
    %v62 = vld [vmem:[#allocation6 + $0x8] sm:$0xff]
    %v63 = vld [vmem:[#allocation6 + $0x10] sm:$0xff]
    %v64 = vld [vmem:[#allocation6 + $0x18] sm:$0xff]
    %vm65 = vcmask 261120
    %v67 = vsel %vm65, %v57, 0
    %v70 = vsel %vm65, %v58, 0
    %v73 = vsel %vm65, %v59, 0
    %v76 = vsel %vm65, %v60, 0
    %78 = vmatpush.msra.mxu0 0.0
    %79 = vmatpush.msra.mxu0 0.0
    %80 = vmatpush.msra.mxu0 0.0
    %81 = vmatpush.msra.mxu0 0.0
    %82 = vmatpush.msra.mxu0 0.0
    %83 = vmatpush.msra.mxu0 0.0
    %84 = vmatpush.msra.mxu0 0.0
    %85 = vmatpush.msra.mxu0 0.0
    %86 = vmatpush.msra.mxu0 0.0
    %87 = vmatpush.msra.mxu0 0.0
    %88 = vmatpush.msra.mxu0 0.0
    %89 = vmatpush.msra.mxu0 0.0
    %90 = vmatpush.msra.mxu0 %v64
    %91 = vmatpush.msra.mxu0 %v63
    %92 = vmatpush.msra.mxu0 %v62
    %93 = vmatpush.msra.mxu0 %v61
    %94 = vmatmul.f32.gmra.mxu0 %v67
    %v95 = vpop.f32.mrf.mxu0
    %v96 = vadd.f32 0.0, %v95
    %97 = vmatmul.f32.gmra.mxu0 %v70
    %v98 = vpop.f32.mrf.mxu0
    %v99 = vadd.f32 0.0, %v98
    %100 = vmatmul.f32.gmra.mxu0 %v73
    %v101 = vpop.f32.mrf.mxu0
    %v102 = vadd.f32 0.0, %v101
    %103 = vmatmul.f32.gmra.mxu0 %v76
    %v104 = vpop.f32.mrf.mxu0
    %v105 = vadd.f32 0.0, %v104
    %106 = vdwg.mxu0
    %v107 = vadd.f32 %v53, %v96
    %v108 = vadd.f32 %v54, %v99
    %v109 = vadd.f32 %v55, %v102
    %v110 = vadd.f32 %v56, %v105
    %vm111 = vcmask 785408
    %112 = vst.msk [vmem:[#allocation2] sm:$0xff] %vm111, %v107
    %113 = vst.msk [vmem:[#allocation2 + $0x8] sm:$0xff] %vm111, %v108
    %114 = vst.msk [vmem:[#allocation2 + $0x10] sm:$0xff] %vm111, %v109
    %115 = vst.msk [vmem:[#allocation2 + $0x18] sm:$0xff] %vm111, %v110
    // Predicated region
    $region22: #{tpu_custom_call.1} parent=1 // pred_check
      %p116 = pneg %p44
    $region23: #{tpu_custom_call.1} parent=1 // pred_check_branch
      %118 = sbr.rel (%p116) target = $region25
    $region24: #{tpu_custom_call.1} parent=1 // pred_region
      %v119 = vld [vmem:[#allocation2] sm:$0xff]
      %v120 = vld [vmem:[#allocation2 + $0x8] sm:$0xff]
      %v121 = vld [vmem:[#allocation2 + $0x10] sm:$0xff]
      %v122 = vld [vmem:[#allocation2 + $0x18] sm:$0xff]
      %123 = vst.msk [vmem:[#allocation8] sm:$0xff] %vm111, %v119
      %124 = vst.msk [vmem:[#allocation8 + $0x8] sm:$0xff] %vm111, %v120
      %125 = vst.msk [vmem:[#allocation8 + $0x10] sm:$0xff] %vm111, %v121
      %126 = vst.msk [vmem:[#allocation8 + $0x18] sm:$0xff] %vm111, %v122
    $region25: #{tpu_custom_call.1} parent=1 // pred_fallthru
      _
    // Predicated region
    $region26: #{tpu_custom_call.1} parent=1 // pred_check
      _
    $region27: #{tpu_custom_call.1} parent=1 // pred_check_branch
      %128 = sbr.rel (0) target = $region29
    $region28: #{tpu_custom_call.1} parent=1 // pred_region
      %130 = vsyncadd [#allocation5], 0
      %s131 = sshll.u32 [#allocation8], 4
      %s132 = int_to_ptr.vmem [resolvable:$true] %s131
      %s133 = sshll.u32 %s2, 4
      %s134 = int_to_ptr.hbm [resolvable:$true] %s133
      %139 = dma.vmem_to_hbm [thread:$0]  %s132, 512, %s134, [#allocation5], 128, 128, 8
    $region29: #{tpu_custom_call.1} parent=1 // pred_fallthru
      _
    // Predicated region
    $region30: #{tpu_custom_call.1} parent=1 // pred_check
      _
    $region31: #{tpu_custom_call.1} parent=1 // pred_check_branch
      %141 = sbr.rel (0) target = $region33
    $region32: #{tpu_custom_call.1} parent=1 // pred_region
      %143 = dma.done [#allocation5], 512
    $region33: #{tpu_custom_call.1} parent=1 // pred_fallthru
      _
    %144 = vsyncpa [#allocation4], 1
    %145 = vsyncpa [#allocation7], 1
    %146 = vsyncpa [#allocation5], 1

</llo_original>
